<compile_context>
chip_gen: v5e
topology: v5e:2x2
jax: 0.10.0
libtpu: 0.0.40
codegen_flags: <defaults>
</compile_context>

<pallas_src>
import math

import jax
import jax.numpy as jnp
from jax.experimental import pallas as pl
from jax.experimental.pallas import tpu as pltpu

_LANE = 128                            # lane width: last dim of every tile
_TARGET_TILE_BYTES = 8 * 1024 * 1024   # ~8 MiB/tile -> <5% per-step overhead
_VMEM_LIMIT_BYTES = 32 * 1024 * 1024   # 2 x 8 MiB buffers + headroom; safe on
                                       # v5e/v6e (128 MiB) and v7x (64 MiB)


def _constant_fill_kernel(value_ref, o_ref):
    # value_ref: (1,) scalar parameter in SMEM.  Pure vector-store fill; no
    # vector loads, no extra elementwise work.
    v = value_ref[0].astype(o_ref.dtype)
    o_ref[...] = jnp.full(o_ref.shape, v, dtype=o_ref.dtype)


def constant_forward(x: jax.Array, value: jax.Array) -> jax.Array:
    """Return a tensor of the same shape/dtype as `x` filled with `value`."""
    shape = x.shape
    dtype = x.dtype
    total = math.prod(shape) if shape else 1

    itemsize = jnp.dtype(dtype).itemsize
    # Sublane packing per dtype: 8 (f32) / 16 (bf16) / 32 (int8/fp8).
    pack = max(8, 32 // itemsize)

    # Lane-dense flat slab: (rows, 128). rows = ceil(total / 128).
    rows = -(-total // _LANE)

    # Tile: up to ~8 MiB of output bytes, multiple of the sublane packing,
    # never larger than the (pack-rounded) row count.
    target_rows = max(pack, _TARGET_TILE_BYTES // (_LANE * itemsize))
    target_rows = (target_rows // pack) * pack
    tile_rows = min(target_rows, -(-rows // pack) * pack)

    grid = (pl.cdiv(rows, tile_rows),)   # ragged last block clipped by Pallas
    out_bytes = rows * _LANE * itemsize

    flat = pl.pallas_call(
        _constant_fill_kernel,
        out_shape=jax.ShapeDtypeStruct((rows, _LANE), dtype),
        grid=grid,
        in_specs=[
            # Scalar parameter, untiled, in SMEM; no per-step DMA of `x`.
            pl.BlockSpec(memory_space=pltpu.MemorySpace.SMEM),
        ],
        out_specs=pl.BlockSpec((tile_rows, _LANE), lambda i: (i, 0)),
        compiler_params=pltpu.CompilerParams(
            dimension_semantics=("parallel",),
            vmem_limit_bytes=_VMEM_LIMIT_BYTES,
        ),
        cost_estimate=pl.CostEstimate(
            flops=0, transcendentals=0, bytes_accessed=out_bytes
        ),
    )(value)

    if total == rows * _LANE:
        # Lane-aligned shapes (the common case): pure view reshape, no copy.
        return flat.reshape(shape)
    # Ragged tail (< one lane row of padding): drop it, then reshape.
    # TODO(synk): integer x dtypes truncate `value` here, whereas PyTorch
    # promotes ones_like(x) * float_param to float.
    return flat.reshape(-1)[:total].reshape(shape)


if __name__ == "__main__":
    key = jax.random.PRNGKey(0)
    k_val, k_x = jax.random.split(key)

    # Deterministic parameter init, matching nn.Parameter(torch.randn(1)).
    value = jax.random.normal(k_val, (1,), dtype=jnp.float32)

    # Small NCHW input consistent with a conv-style baseline module.
    x = jax.random.normal(k_x, (2, 4, 16, 16), dtype=jnp.float32)

    out = constant_forward(x, value)
    out = jax.block_until_ready(out)

    # Correctness check against the trivially-known reference.
    ref = jnp.ones_like(x) * value[0]
    assert out.shape == x.shape and out.dtype == x.dtype
    assert bool(jnp.allclose(out, ref)), "mismatch vs reference"

    print("KERNEL_OK")
</pallas_src>

<mosaic_0001>
module attributes {stable_mosaic.version = 11 : i64} {
  func.func @_constant_fill_kernel(%arg0: i32, %arg1: memref<1xf32, #tpu.memory_space<smem>>, %arg2: memref<16x128xf32, #tpu.memory_space<vmem>>) attributes {dimension_semantics = [#tpu.dimension_semantics<parallel>], iteration_bounds = array<i64: 1>, scalar_prefetch = 0 : i64, scratch_operands = 0 : i64, tpu.core_type = #tpu.core_type<tc>, window_params = [{transform_indices = @transform_0, window_bounds = array<i64: 1>}, {transform_indices = @transform_1, window_bounds = array<i64: 16, 128>}]} {
    %c0 = arith.constant 0 : index
    %0 = memref.load %arg1[%c0] : memref<1xf32, #tpu.memory_space<smem>>
    %1 = vector.broadcast %0 : f32 to vector<16x128xf32>
    %c0_0 = arith.constant 0 : index
    %c0_1 = arith.constant 0 : index
    %2 = vector.load %arg2[%c0_0, %c0_1] : memref<16x128xf32, #tpu.memory_space<vmem>>, vector<16x128xf32>
    tpu.vector_store %arg2[%c0_0, %c0_1], %1 {strides = array<i32>} : memref<16x128xf32, #tpu.memory_space<vmem>>, vector<16x128xf32>,
    return
  }
  func.func @transform_0(%arg0: i32) -> i32 {
    %c0_i32 = arith.constant 0 : i32
    %c0_i32_0 = arith.constant 0 : i32
    return %c0_i32 : i32
  }
  func.func @transform_1(%arg0: i32) -> (i32, i32) {
    %c0_i32 = arith.constant 0 : i32
    %c0_i32_0 = arith.constant 0 : i32
    return %arg0, %c0_i32 : i32, i32
  }
}

</mosaic_0001>

<llo_original>
// kernel: tpu_custom_call.1
$region0: #{tpu_custom_call.1}
  #allocation0 [shape = 'u32[]', space=smem, size = 0x4, offset = 0x4, fixed_abs, tag = 'smem constant byte address 0x4 - core index']
  #allocation1 [shape = 'u32[72,128]{1,0:T(1,128)}', space=vmem, size = 0x9000, scoped, tag = 'internal scratch']
  #allocation2 [shape = 'f32[1]{0:T(128)S(6)}', space=smem, size = 0x200, scoped, tag = 'scoped memory for tpu_custom_call.1']
  %s0 = inlined_call_operand.<no memory space> [shape: f32[1], index: 0, kind: input, shape index: {}]
  %s1 = inlined_call_operand.hbm [shape: f32[16,128], index: 1, kind: output, shape index: {}]
  %s2 = sld [smem:[#allocation0]]
  $region14: #{tpu_custom_call.1} parent=0
    _
  %s4 = ssub.s32 1, %s2
  %s5 = scalar_select 0, %s4, %s2
  %6 = sst [smem:[#allocation2]] %s0
  $region1: #{tpu_custom_call.1} parent=0
    #allocation3 [shape = 'u8[8192]{0}', space=vmem, size = 0x2000, scoped, tag = 'output window, operand 0, single buffered']
    #allocation4 [shape = 's32[1]{0}', space=sflag, size = 0x4, scoped, tag = 'scoped memory for tpu_custom_call.1']
    %7 = vsyncpa [#allocation4], 0
    // Predicated region
    $region2: #{tpu_custom_call.1} parent=1 // pred_check
      _
    $region3: #{tpu_custom_call.1} parent=1 // pred_check_branch
      %9 = sbr.rel (0) target = $region5
    $region4: #{tpu_custom_call.1} parent=1 // pred_region
      _
    $region5: #{tpu_custom_call.1} parent=1 // pred_fallthru
      _
    %s10 = sld [smem:[#allocation2]]
    %v11 = vstv %s10
    %12 = vst [vmem:[#allocation3] sm:$0xff] %v11
    %13 = vst [vmem:[#allocation3 + $0x8] sm:$0xff] %v11
    // Predicated region
    $region6: #{tpu_custom_call.1} parent=1 // pred_check
      _
    $region7: #{tpu_custom_call.1} parent=1 // pred_check_branch
      %15 = sbr.rel (0) target = $region9
    $region8: #{tpu_custom_call.1} parent=1 // pred_region
      %17 = vsyncadd [#allocation4], 0
      %s18 = sshll.u32 [#allocation3], 4
      %s19 = int_to_ptr.vmem [resolvable:$true] %s18
      %s20 = sshll.u32 %s1, 4
      %s21 = int_to_ptr.hbm [resolvable:$true] %s20
      %26 = dma.vmem_to_hbm [thread:$0]  %s19, 256, %s21, [#allocation4], 128, 128, 8
    $region9: #{tpu_custom_call.1} parent=1 // pred_fallthru
      _
    // Predicated region
    $region10: #{tpu_custom_call.1} parent=1 // pred_check
      _
    $region11: #{tpu_custom_call.1} parent=1 // pred_check_branch
      %28 = sbr.rel (0) target = $region13
    $region12: #{tpu_custom_call.1} parent=1 // pred_region
      %30 = dma.done [#allocation4], 256
    $region13: #{tpu_custom_call.1} parent=1 // pred_fallthru
      _
    %31 = vsyncpa [#allocation4], 1

</llo_original>
